<compile_context>
chip_gen: v5e
topology: v5e:2x2
jax: 0.10.0
libtpu: 0.0.40
codegen_flags: <defaults>
</compile_context>

<pallas_src>
import functools

import jax
import jax.numpy as jnp
from jax.experimental import pallas as pl
from jax.experimental.pallas import tpu as pltpu


def _round_up(n, m):
    return ((n + m - 1) // m) * m


# ----------------------------------------------------------------------------
# Generation-aware VMEM budgeting.
# ----------------------------------------------------------------------------
def _vmem_capacity_bytes():
    try:
        info = pltpu.get_tpu_info()
        for attr in ("vmem_capacity_bytes", "vmem_bytes", "vmem_size_bytes"):
            v = getattr(info, attr, None)
            if v:
                return int(v)
    except Exception:
        pass
    return 64 * 1024 * 1024  # conservative fallback (v7x-sized VMEM)


def _budgets():
    vmem = _vmem_capacity_bytes()
    if vmem >= 128 * 1024 * 1024:          # v5e / v6e: 128 MiB physical VMEM
        vmem_limit = 96 * 1024 * 1024
    else:                                   # v7x: 64 MiB physical VMEM
        vmem_limit = min(40 * 1024 * 1024, (vmem * 5) // 8)
    # Double-buffered input block + double-buffered output block (+ tiny
    # params / scratch headroom) must fit under vmem_limit.
    max_block = max(2 * 1024 * 1024, (vmem_limit - 4 * 1024 * 1024) // 4)
    return vmem_limit, max_block


# ----------------------------------------------------------------------------
# Single-pass kernel: pool + fused (stacked avg/max) MLP + scale in one block.
# x block: (Bt, C, HW) with the full C and HW extents (masked stores handle
# ragged batch tails; no padding of x is ever materialized in HBM).
# ----------------------------------------------------------------------------
def _cam_fused_kernel(x_ref, w1_ref, b1_ref, w2_ref, b2_ref, o_ref, *, hw_valid):
    x = x_ref[...]                                       # native dtype, no f32 copy
    bt = x.shape[0]

    ssum = jnp.sum(x, axis=2, dtype=jnp.float32)         # (Bt, C) f32 accumulate
    smax = jnp.max(x, axis=2).astype(jnp.float32)        # (Bt, C)
    avg = ssum * (1.0 / hw_valid)

    pooled = jnp.concatenate([avg, smax], axis=0)        # (2*Bt, C)
    h = jnp.maximum(
        jnp.dot(pooled, w1_ref[...], preferred_element_type=jnp.float32)
        + b1_ref[...], 0.0)
    s = jax.nn.sigmoid(
        jnp.dot(h, w2_ref[...], preferred_element_type=jnp.float32)
        + b2_ref[...])
    weights = (s[:bt, :] + s[bt:, :]).astype(x.dtype)    # (Bt, C)

    o_ref[...] = x * weights[:, :, None]                 # lane-broadcast multiply


def _run_single_pass(x_flat, w1, b1, w2, b2, *, vmem_limit, max_block):
    B, C, HW = x_flat.shape
    hidden = w1.shape[1]
    itemsize = x_flat.dtype.itemsize
    row_bytes = C * HW * itemsize

    # Maximize the batch block within the per-generation VMEM block budget.
    bt = max(1, min(B, max_block // row_bytes))
    # Keep >= 2 grid steps (pipeline overlap / v7x's two TensorCores) only
    # when splitting does not shrink blocks below the multi-MiB DMA range.
    if bt == B and B > 1 and B * row_bytes >= 4 * 1024 * 1024:
        bt = (B + 1) // 2
    grid = (pl.cdiv(B, bt),)
    blk = (bt, C, HW)

    kernel = functools.partial(_cam_fused_kernel, hw_valid=HW)
    return pl.pallas_call(
        kernel,
        out_shape=jax.ShapeDtypeStruct(x_flat.shape, x_flat.dtype),
        grid_spec=pltpu.PrefetchScalarGridSpec(
            num_scalar_prefetch=0,
            grid=grid,
            in_specs=[
                pl.BlockSpec(blk, lambda b: (b, 0, 0)),
                # Tiny MLP params stay VMEM-resident (constant index maps).
                pl.BlockSpec((C, hidden), lambda b: (0, 0)),
                pl.BlockSpec((1, hidden), lambda b: (0, 0)),
                pl.BlockSpec((hidden, C), lambda b: (0, 0)),
                pl.BlockSpec((1, C), lambda b: (0, 0)),
            ],
            out_specs=pl.BlockSpec(blk, lambda b: (b, 0, 0)),
        ),
        compiler_params=pltpu.CompilerParams(
            dimension_semantics=("parallel",),
            vmem_limit_bytes=vmem_limit),
    )(x_flat, w1, b1, w2, b2)


# ----------------------------------------------------------------------------
# Two-phase path for (C, HW) slabs over the VMEM block budget:
#   phase 1: HW-tiled pooling with the tiny MLP fused into the last HW step,
#            emitting per-(b, c) weights directly (no pooled-stats round trip).
#   phase 2: HW-tiled broadcast multiply.
# ----------------------------------------------------------------------------
def _pool_mlp_kernel(x_ref, w1_ref, b1_ref, w2_ref, b2_ref, w_out_ref,
                     sum_sc, max_sc, *, hw_valid, hw_tile):
    hw_idx = pl.program_id(1)
    n_hw = pl.num_programs(1)
    x = x_ref[...]                                        # (1, C, hw_tile)

    if hw_valid % hw_tile != 0:
        lane = jax.lax.broadcasted_iota(jnp.int32, x.shape, dimension=2)
        valid = (hw_idx * hw_tile + lane) < hw_valid
        xs = jnp.where(valid, x, jnp.zeros((), x.dtype))
        xm = jnp.where(valid, x, jnp.asarray(-jnp.inf, dtype=x.dtype))
    else:
        xs, xm = x, x

    psum = jnp.sum(xs, axis=2, dtype=jnp.float32)         # (1, C)
    pmax = jnp.max(xm, axis=2).astype(jnp.float32)        # (1, C)

    @pl.when(hw_idx == 0)
    def _():
        sum_sc[...] = psum
        max_sc[...] = pmax

    @pl.when(hw_idx > 0)
    def _():
        sum_sc[...] = sum_sc[...] + psum
        max_sc[...] = jnp.maximum(max_sc[...], pmax)

    @pl.when(hw_idx == n_hw - 1)
    def _():
        avg = sum_sc[...] * (1.0 / hw_valid)
        pooled = jnp.concatenate([avg, max_sc[...]], axis=0)      # (2, C)
        h = jnp.maximum(
            jnp.dot(pooled, w1_ref[...], preferred_element_type=jnp.float32)
            + b1_ref[...], 0.0)
        s = jax.nn.sigmoid(
            jnp.dot(h, w2_ref[...], preferred_element_type=jnp.float32)
            + b2_ref[...])
        w_out_ref[...] = (s[0:1, :] + s[1:2, :])[:, None, :]      # (1, 1, C)


def _scale_kernel(x_ref, w_ref, o_ref):
    w = w_ref[...].astype(o_ref.dtype)                    # (1, C, 1)
    o_ref[...] = x_ref[...] * w                           # lane-broadcast multiply


def _run_two_phase(x_flat, w1, b1, w2, b2, *, vmem_limit, max_block, hw_tile=None):
    B, C, HW = x_flat.shape
    hidden = w1.shape[1]
    itemsize = x_flat.dtype.itemsize

    if hw_tile is None:
        per_col_bytes = C * itemsize
        t = min(max_block, 8 * 1024 * 1024) // per_col_bytes
        hw_tile = max(128, (t // 128) * 128)
        hw_tile = min(hw_tile, _round_up(HW, 128))
    assert hw_tile % 128 == 0, "hw_tile must be a multiple of 128"
    n_hw = pl.cdiv(HW, hw_tile)

    # Phase 1: pooled stats + fused MLP -> weights (B, 1, C) f32.
    weights = pl.pallas_call(
        functools.partial(_pool_mlp_kernel, hw_valid=HW, hw_tile=hw_tile),
        out_shape=jax.ShapeDtypeStruct((B, 1, C), jnp.float32),
        grid_spec=pltpu.PrefetchScalarGridSpec(
            num_scalar_prefetch=0,
            grid=(B, n_hw),
            in_specs=[
                pl.BlockSpec((1, C, hw_tile), lambda b, s: (b, 0, s)),
                pl.BlockSpec((C, hidden), lambda b, s: (0, 0)),
                pl.BlockSpec((1, hidden), lambda b, s: (0, 0)),
                pl.BlockSpec((hidden, C), lambda b, s: (0, 0)),
                pl.BlockSpec((1, C), lambda b, s: (0, 0)),
            ],
            out_specs=pl.BlockSpec((1, 1, C), lambda b, s: (b, 0, 0)),
            scratch_shapes=[pltpu.VMEM((1, C), jnp.float32),
                            pltpu.VMEM((1, C), jnp.float32)],
        ),
        compiler_params=pltpu.CompilerParams(
            dimension_semantics=("parallel", "arbitrary"),
            vmem_limit_bytes=vmem_limit),
    )(x_flat, w1, b1, w2, b2)

    # (B, 1, C) -> (B, C, 1) is a free row-major reshape (no HBM copy).
    weights_col = weights.reshape(B, C, 1)

    # Phase 2: broadcast-multiply, HW-tiled.
    return pl.pallas_call(
        _scale_kernel,
        out_shape=jax.ShapeDtypeStruct(x_flat.shape, x_flat.dtype),
        grid_spec=pltpu.PrefetchScalarGridSpec(
            num_scalar_prefetch=0,
            grid=(B, n_hw),
            in_specs=[
                pl.BlockSpec((1, C, hw_tile), lambda b, s: (b, 0, s)),
                pl.BlockSpec((1, C, 1), lambda b, s: (b, 0, 0)),
            ],
            out_specs=pl.BlockSpec((1, C, hw_tile), lambda b, s: (b, 0, s)),
        ),
        compiler_params=pltpu.CompilerParams(
            dimension_semantics=("parallel", "parallel"),
            vmem_limit_bytes=vmem_limit),
    )(x_flat, weights_col)


# ----------------------------------------------------------------------------
# Public wrapper.
# ----------------------------------------------------------------------------
def channel_attention(x, w1, b1, w2, b2, *, force_two_phase=False, hw_tile=None):
    """SENet/CBAM channel attention. x: (B, C, H, W). Returns (B, C, H, W)."""
    B, C, H, W = x.shape
    HW = H * W
    x_flat = x.reshape(B, C, HW)                  # free (row-major) reshape

    vmem_limit, max_block = _budgets()
    row_bytes = C * HW * x.dtype.itemsize

    if force_two_phase or row_bytes > max_block:
        # Slab exceeds the per-block VMEM budget (e.g. huge feature maps on
        # v7x's 64 MiB VMEM): HW-tiled pool+MLP phase, then HW-tiled scale.
        out_flat = _run_two_phase(x_flat, w1, b1, w2, b2,
                                  vmem_limit=vmem_limit, max_block=max_block,
                                  hw_tile=hw_tile)
    else:
        out_flat = _run_single_pass(x_flat, w1, b1, w2, b2,
                                    vmem_limit=vmem_limit, max_block=max_block)
    return out_flat.reshape(B, C, H, W)


# ----------------------------------------------------------------------------
# Pure-JAX reference (matches the PyTorch module).
# ----------------------------------------------------------------------------
def _reference(x, w1, b1, w2, b2):
    xf = x.astype(jnp.float32)
    avg = jnp.mean(xf, axis=(2, 3))               # (B, C)
    mx = jnp.max(xf, axis=(2, 3))                 # (B, C)

    def mlp(v):
        h = jnp.maximum(v @ w1 + b1, 0.0)
        return jax.nn.sigmoid(h @ w2 + b2)

    weights = mlp(avg) + mlp(mx)                  # (B, C)
    return xf * weights[:, :, None, None]


if __name__ == "__main__":
    key = jax.random.PRNGKey(0)

    def make_params(k, C, reduction):
        hidden = max(1, C // reduction)
        k1, k2, k3, k4 = jax.random.split(k, 4)
        lim1 = 1.0 / jnp.sqrt(C)
        lim2 = 1.0 / jnp.sqrt(hidden)
        w1 = jax.random.uniform(k1, (C, hidden), jnp.float32, -lim1, lim1)
        b1 = jax.random.uniform(k2, (1, hidden), jnp.float32, -lim1, lim1)
        w2 = jax.random.uniform(k3, (hidden, C), jnp.float32, -lim2, lim2)
        b2 = jax.random.uniform(k4, (1, C), jnp.float32, -lim2, lim2)
        return w1, b1, w2, b2

    # 1) Main test: single-pass, lane-aligned HW (16x16 = 256).
    kx, kp, key = jax.random.split(key, 3)
    B, C, H, W = 2, 64, 16, 16
    x = jax.random.normal(kx, (B, C, H, W), jnp.float32)
    w1, b1, w2, b2 = make_params(kp, C, 16)
    out = jax.block_until_ready(channel_attention(x, w1, b1, w2, b2))
    ref = _reference(x, w1, b1, w2, b2)
    assert out.shape == x.shape
    assert jnp.allclose(out, ref, atol=1e-5, rtol=1e-5), "mismatch (single-pass)"

    # 2) Unaligned small HW (7x7 = 49): full-dim ragged lane block, no padding.
    kx, kp, key = jax.random.split(key, 3)
    B, C, H, W = 2, 256, 7, 7
    x = jax.random.normal(kx, (B, C, H, W), jnp.float32)
    w1, b1, w2, b2 = make_params(kp, C, 16)
    out = jax.block_until_ready(channel_attention(x, w1, b1, w2, b2))
    ref = _reference(x, w1, b1, w2, b2)
    assert jnp.allclose(out, ref, atol=1e-5, rtol=1e-5), "mismatch (ragged HW)"

    # 3) Two-phase HW-tiled path (forced), unaligned HW tail (400 = 3*128+16).
    kx, kp, key = jax.random.split(key, 3)
    B, C, H, W = 2, 64, 20, 20
    x = jax.random.normal(kx, (B, C, H, W), jnp.float32)
    w1, b1, w2, b2 = make_params(kp, C, 16)
    out = jax.block_until_ready(
        channel_attention(x, w1, b1, w2, b2, force_two_phase=True, hw_tile=128))
    ref = _reference(x, w1, b1, w2, b2)
    assert jnp.allclose(out, ref, atol=1e-5, rtol=1e-5), "mismatch (two-phase)"

    # 4) bf16 activations (f32 pooling/MLP accumulation inside the kernel).
    kx, kp, key = jax.random.split(key, 3)
    B, C, H, W = 2, 64, 16, 16
    x = jax.random.normal(kx, (B, C, H, W), jnp.float32).astype(jnp.bfloat16)
    w1, b1, w2, b2 = make_params(kp, C, 16)
    out = jax.block_until_ready(channel_attention(x, w1, b1, w2, b2))
    ref = _reference(x.astype(jnp.float32), w1, b1, w2, b2)
    assert jnp.allclose(out.astype(jnp.float32), ref, atol=2e-2, rtol=2e-2), \
        "mismatch (bf16)"

    print("KERNEL_OK")
</pallas_src>

<mosaic_0001>
module attributes {stable_mosaic.version = 11 : i64} {
  func.func @_cam_fused_kernel(%arg0: i32, %arg1: memref<2x64x256xf32, #tpu.memory_space<vmem>>, %arg2: memref<64x4xf32, #tpu.memory_space<vmem>>, %arg3: memref<1x4xf32, #tpu.memory_space<vmem>>, %arg4: memref<4x64xf32, #tpu.memory_space<vmem>>, %arg5: memref<1x64xf32, #tpu.memory_space<vmem>>, %arg6: memref<2x64x256xf32, #tpu.memory_space<vmem>>) attributes {dimension_semantics = [#tpu.dimension_semantics<parallel>], iteration_bounds = array<i64: 1>, scalar_prefetch = 0 : i64, scratch_operands = 0 : i64, tpu.core_type = #tpu.core_type<tc>, window_params = [{transform_indices = @transform_0, window_bounds = array<i64: 2, 64, 256>}, {pipeline_mode = #tpu.pipeline_mode<synchronous>, transform_indices = @transform_1, window_bounds = array<i64: 64, 4>}, {pipeline_mode = #tpu.pipeline_mode<synchronous>, transform_indices = @transform_2, window_bounds = array<i64: 1, 4>}, {pipeline_mode = #tpu.pipeline_mode<synchronous>, transform_indices = @transform_3, window_bounds = array<i64: 4, 64>}, {pipeline_mode = #tpu.pipeline_mode<synchronous>, transform_indices = @transform_4, window_bounds = array<i64: 1, 64>}, {transform_indices = @transform_5, window_bounds = array<i64: 2, 64, 256>}]} {
    %c0 = arith.constant 0 : index
    %c0_0 = arith.constant 0 : index
    %c0_1 = arith.constant 0 : index
    %0 = vector.load %arg1[%c0, %c0_0, %c0_1] : memref<2x64x256xf32, #tpu.memory_space<vmem>>, vector<2x64x256xf32>
    %cst = arith.constant dense<0.000000e+00> : vector<2x64xf32>
    %1 = vector.multi_reduction <add>, %0, %cst [2] : vector<2x64x256xf32> to vector<2x64xf32>
    %cst_2 = arith.constant dense<0xFF800000> : vector<2x64xf32>
    %2 = vector.multi_reduction <maximumf>, %0, %cst_2 [2] : vector<2x64x256xf32> to vector<2x64xf32>
    %cst_3 = arith.constant 3.906250e-03 : f32
    %3 = vector.broadcast %cst_3 : f32 to vector<2x64xf32>
    %4 = arith.mulf %1, %3 : vector<2x64xf32>
    %5 = tpu.concatenate %4, %2 in 0 : vector<2x64xf32>, vector<2x64xf32> -> vector<4x64xf32>
    %c0_4 = arith.constant 0 : index
    %c0_5 = arith.constant 0 : index
    %6 = vector.load %arg2[%c0_4, %c0_5] : memref<64x4xf32, #tpu.memory_space<vmem>>, vector<64x4xf32>
    %cst_6 = arith.constant dense<0.000000e+00> : vector<4x4xf32>
    %7 = tpu.matmul %5, %6, %cst_6 {dimension_numbers = #tpu.dot_dimension_numbers<[1], [0], [0], [1], [0, 0, 1, 1], [], []>} : vector<4x64xf32>, vector<64x4xf32>, vector<4x4xf32> -> vector<4x4xf32>
    %c0_7 = arith.constant 0 : index
    %c0_8 = arith.constant 0 : index
    %8 = vector.load %arg3[%c0_7, %c0_8] : memref<1x4xf32, #tpu.memory_space<vmem>>, vector<1x4xf32>
    %9 = vector.broadcast %8 : vector<1x4xf32> to vector<4x4xf32>
    %10 = arith.addf %7, %9 : vector<4x4xf32>
    %cst_9 = arith.constant 0.000000e+00 : f32
    %11 = vector.broadcast %cst_9 : f32 to vector<4x4xf32>
    %12 = arith.maximumf %10, %11 : vector<4x4xf32>
    %c0_10 = arith.constant 0 : index
    %c0_11 = arith.constant 0 : index
    %13 = vector.load %arg4[%c0_10, %c0_11] : memref<4x64xf32, #tpu.memory_space<vmem>>, vector<4x64xf32>
    %cst_12 = arith.constant dense<0.000000e+00> : vector<4x64xf32>
    %14 = tpu.matmul %12, %13, %cst_12 {dimension_numbers = #tpu.dot_dimension_numbers<[1], [0], [0], [1], [0, 0, 1, 1], [], []>} : vector<4x4xf32>, vector<4x64xf32>, vector<4x64xf32> -> vector<4x64xf32>
    %c0_13 = arith.constant 0 : index
    %c0_14 = arith.constant 0 : index
    %15 = vector.load %arg5[%c0_13, %c0_14] : memref<1x64xf32, #tpu.memory_space<vmem>>, vector<1x64xf32>
    %16 = vector.broadcast %15 : vector<1x64xf32> to vector<4x64xf32>
    %17 = arith.addf %14, %16 : vector<4x64xf32>
    %18 = arith.negf %17 : vector<4x64xf32>
    %19 = math.exp %18 : vector<4x64xf32>
    %cst_15 = arith.constant 1.000000e+00 : f32
    %20 = vector.broadcast %cst_15 : f32 to vector<4x64xf32>
    %21 = arith.addf %20, %19 : vector<4x64xf32>
    %22 = arith.divf %20, %21 : vector<4x64xf32>
    %23 = vector.extract_strided_slice %22 {offsets = [0, 0], sizes = [2, 64], strides = [1, 1]} : vector<4x64xf32> to vector<2x64xf32>
    %24 = vector.extract_strided_slice %22 {offsets = [2, 0], sizes = [2, 64], strides = [1, 1]} : vector<4x64xf32> to vector<2x64xf32>
    %25 = arith.addf %23, %24 : vector<2x64xf32>
    %26 = vector.shape_cast %25 : vector<2x64xf32> to vector<2x64x1xf32>
    %27 = vector.broadcast %26 : vector<2x64x1xf32> to vector<2x64x256xf32>
    %28 = arith.mulf %0, %27 : vector<2x64x256xf32>
    %c0_16 = arith.constant 0 : index
    %c0_17 = arith.constant 0 : index
    %c0_18 = arith.constant 0 : index
    %29 = vector.load %arg6[%c0_16, %c0_17, %c0_18] : memref<2x64x256xf32, #tpu.memory_space<vmem>>, vector<2x64x256xf32>
    tpu.vector_store %arg6[%c0_16, %c0_17, %c0_18], %28 {strides = array<i32>} : memref<2x64x256xf32, #tpu.memory_space<vmem>>, vector<2x64x256xf32>,
    return
  }
  func.func @transform_0(%arg0: i32) -> (i32, i32, i32) {
    %c0_i32 = arith.constant 0 : i32
    %c0_i32_0 = arith.constant 0 : i32
    %c0_i32_1 = arith.constant 0 : i32
    return %arg0, %c0_i32, %c0_i32_0 : i32, i32, i32
  }
  func.func @transform_1(%arg0: i32) -> (i32, i32) {
    %c0_i32 = arith.constant 0 : i32
    %c0_i32_0 = arith.constant 0 : i32
    %c0_i32_1 = arith.constant 0 : i32
    return %c0_i32, %c0_i32_0 : i32, i32
  }
  func.func @transform_2(%arg0: i32) -> (i32, i32) {
    %c0_i32 = arith.constant 0 : i32
    %c0_i32_0 = arith.constant 0 : i32
    %c0_i32_1 = arith.constant 0 : i32
    return %c0_i32, %c0_i32_0 : i32, i32
  }
  func.func @transform_3(%arg0: i32) -> (i32, i32) {
    %c0_i32 = arith.constant 0 : i32
    %c0_i32_0 = arith.constant 0 : i32
    %c0_i32_1 = arith.constant 0 : i32
    return %c0_i32, %c0_i32_0 : i32, i32
  }
  func.func @transform_4(%arg0: i32) -> (i32, i32) {
    %c0_i32 = arith.constant 0 : i32
    %c0_i32_0 = arith.constant 0 : i32
    %c0_i32_1 = arith.constant 0 : i32
    return %c0_i32, %c0_i32_0 : i32, i32
  }
  func.func @transform_5(%arg0: i32) -> (i32, i32, i32) {
    %c0_i32 = arith.constant 0 : i32
    %c0_i32_0 = arith.constant 0 : i32
    %c0_i32_1 = arith.constant 0 : i32
    return %arg0, %c0_i32, %c0_i32_0 : i32, i32, i32
  }
}

</mosaic_0001>

<llo_original>
// kernel: tpu_custom_call.1
$region0: #{tpu_custom_call.1}
  #allocation0 [shape = 'u32[]', space=smem, size = 0x4, offset = 0x4, fixed_abs, tag = 'smem constant byte address 0x4 - core index']
  #allocation1 [shape = 'u32[72,128]{1,0:T(1,128)}', space=vmem, size = 0x9000, scoped, tag = 'internal scratch']
  %s0 = inlined_call_operand.hbm [shape: f32[2,64,256], index: 0, kind: input, shape index: {}]
  %s1 = inlined_call_operand.vmem [shape: f32[64,4], index: 1, kind: input, shape index: {}]
  %s2 = inlined_call_operand.vmem [shape: f32[1,4], index: 2, kind: input, shape index: {}]
  %s3 = inlined_call_operand.vmem [shape: f32[4,64], index: 3, kind: input, shape index: {}]
  %s4 = inlined_call_operand.vmem [shape: f32[1,64], index: 4, kind: input, shape index: {}]
  %s5 = inlined_call_operand.hbm [shape: f32[2,64,256], index: 5, kind: output, shape index: {}]
  %s6 = sld [smem:[#allocation0]]
  $region34: #{tpu_custom_call.1} parent=0
    _
  %s8 = ssub.s32 1, %s6
  %s9 = scalar_select 0, %s8, %s6
  $region1: #{tpu_custom_call.1} parent=0
    #allocation2 [shape = 'u8[131072]{0}', space=vmem, size = 0x20000, scoped, tag = 'input window, operand 0, single buffered']
    #allocation3 [shape = 's32[1]{0}', space=sflag, size = 0x4, scoped, tag = 'scoped memory for tpu_custom_call.1']
    #allocation4 [shape = 's32[1]{0}', space=sflag, size = 0x4, scoped, tag = 'scoped memory for tpu_custom_call.1']
    #allocation5 [shape = 'u8[131072]{0}', space=vmem, size = 0x20000, scoped, tag = 'output window, operand 0, single buffered']
    %10 = vsyncpa [#allocation3], 0
    %11 = vsyncpa [#allocation4], 0
    // Predicated region
    $region2: #{tpu_custom_call.1} parent=1 // pred_check
      _
    $region3: #{tpu_custom_call.1} parent=1 // pred_check_branch
      %13 = sbr.rel (0) target = $region5
    $region4: #{tpu_custom_call.1} parent=1 // pred_region
      %15 = vsyncadd [#allocation3], 0
      %s16 = sshll.u32 %s0, 4
      %s17 = int_to_ptr.hbm [resolvable:$true] %s16
      %s18 = sshll.u32 [#allocation2], 4
      %s19 = int_to_ptr.vmem [resolvable:$true] %s18
      %24 = dma.hbm_to_vmem [thread:$0]  %s17, 4096, %s19, [#allocation3], 256, 256, 16
    $region5: #{tpu_custom_call.1} parent=1 // pred_fallthru
      _
    // Predicated region
    $region6: #{tpu_custom_call.1} parent=1 // pred_check
      _
    $region7: #{tpu_custom_call.1} parent=1 // pred_check_branch
      %26 = sbr.rel (0) target = $region9
    $region8: #{tpu_custom_call.1} parent=1 // pred_region
      _
    $region9: #{tpu_custom_call.1} parent=1 // pred_fallthru
      _
    // Predicated region
    $region10: #{tpu_custom_call.1} parent=1 // pred_check
      _
    $region11: #{tpu_custom_call.1} parent=1 // pred_check_branch
      %28 = sbr.rel (0) target = $region13
    $region12: #{tpu_custom_call.1} parent=1 // pred_region
      _
    $region13: #{tpu_custom_call.1} parent=1 // pred_fallthru
      _
    // Predicated region
    $region14: #{tpu_custom_call.1} parent=1 // pred_check
      _
    $region15: #{tpu_custom_call.1} parent=1 // pred_check_branch
      %30 = sbr.rel (0) target = $region17
    $region16: #{tpu_custom_call.1} parent=1 // pred_region
      _
    $region17: #{tpu_custom_call.1} parent=1 // pred_fallthru
      _
    // Predicated region
    $region18: #{tpu_custom_call.1} parent=1 // pred_check
      _
    $region19: #{tpu_custom_call.1} parent=1 // pred_check_branch
      %32 = sbr.rel (0) target = $region21
    $region20: #{tpu_custom_call.1} parent=1 // pred_region
      _
    $region21: #{tpu_custom_call.1} parent=1 // pred_fallthru
      _
    // Predicated region
    $region22: #{tpu_custom_call.1} parent=1 // pred_check
      _
    $region23: #{tpu_custom_call.1} parent=1 // pred_check_branch
      %34 = sbr.rel (0) target = $region25
    $region24: #{tpu_custom_call.1} parent=1 // pred_region
      %36 = dma.done [#allocation3], 4096
    $region25: #{tpu_custom_call.1} parent=1 // pred_fallthru
      _
    %v37 = vld [vmem:[#allocation2] sm:$0xff]
    %v38 = vld [vmem:[#allocation2 + $0x8] sm:$0xff]
    %v39 = vld [vmem:[#allocation2 + $0x10] sm:$0xff]
    %v40 = vld [vmem:[#allocation2 + $0x18] sm:$0xff]
    %v41 = vld [vmem:[#allocation2 + $0x20] sm:$0xff]
    %v42 = vld [vmem:[#allocation2 + $0x28] sm:$0xff]
    %v43 = vld [vmem:[#allocation2 + $0x30] sm:$0xff]
    %v44 = vld [vmem:[#allocation2 + $0x38] sm:$0xff]
    %v45 = vld [vmem:[#allocation2 + $0x40] sm:$0xff]
    %v46 = vld [vmem:[#allocation2 + $0x48] sm:$0xff]
    %v47 = vld [vmem:[#allocation2 + $0x50] sm:$0xff]
    %v48 = vld [vmem:[#allocation2 + $0x58] sm:$0xff]
    %v49 = vld [vmem:[#allocation2 + $0x60] sm:$0xff]
    %v50 = vld [vmem:[#allocation2 + $0x68] sm:$0xff]
    %v51 = vld [vmem:[#allocation2 + $0x70] sm:$0xff]
    %v52 = vld [vmem:[#allocation2 + $0x78] sm:$0xff]
    %v53 = vld [vmem:[#allocation2 + $0x80] sm:$0xff]
    %v54 = vld [vmem:[#allocation2 + $0x88] sm:$0xff]
    %v55 = vld [vmem:[#allocation2 + $0x90] sm:$0xff]
    %v56 = vld [vmem:[#allocation2 + $0x98] sm:$0xff]
    %v57 = vld [vmem:[#allocation2 + $0xa0] sm:$0xff]
    %v58 = vld [vmem:[#allocation2 + $0xa8] sm:$0xff]
    %v59 = vld [vmem:[#allocation2 + $0xb0] sm:$0xff]
    %v60 = vld [vmem:[#allocation2 + $0xb8] sm:$0xff]
    %v61 = vld [vmem:[#allocation2 + $0xc0] sm:$0xff]
    %v62 = vld [vmem:[#allocation2 + $0xc8] sm:$0xff]
    %v63 = vld [vmem:[#allocation2 + $0xd0] sm:$0xff]
    %v64 = vld [vmem:[#allocation2 + $0xd8] sm:$0xff]
    %v65 = vld [vmem:[#allocation2 + $0xe0] sm:$0xff]
    %v66 = vld [vmem:[#allocation2 + $0xe8] sm:$0xff]
    %v67 = vld [vmem:[#allocation2 + $0xf0] sm:$0xff]
    %v68 = vld [vmem:[#allocation2 + $0xf8] sm:$0xff]
    %v69 = vadd.f32 %v37, %v38
    %70 = vadd.xlane.f32.xlu0 %v69
    %v71 = vpop.xlane.xlu0 %70
    %v72 = vadd.f32 %v39, %v40
    %73 = vadd.xlane.f32.xlu0 %v72
    %v74 = vpop.xlane.xlu0 %73
    %v75 = vadd.f32 %v41, %v42
    %76 = vadd.xlane.f32.xlu0 %v75
    %v77 = vpop.xlane.xlu0 %76
    %v78 = vadd.f32 %v43, %v44
    %79 = vadd.xlane.f32.xlu0 %v78
    %v80 = vpop.xlane.xlu0 %79
    %v81 = vadd.f32 %v45, %v46
    %82 = vadd.xlane.f32.xlu0 %v81
    %v83 = vpop.xlane.xlu0 %82
    %v84 = vadd.f32 %v47, %v48
    %85 = vadd.xlane.f32.xlu0 %v84
    %v86 = vpop.xlane.xlu0 %85
    %v87 = vadd.f32 %v49, %v50
    %88 = vadd.xlane.f32.xlu0 %v87
    %v89 = vpop.xlane.xlu0 %88
    %v90 = vadd.f32 %v51, %v52
    %91 = vadd.xlane.f32.xlu0 %v90
    %v92 = vpop.xlane.xlu0 %91
    %v93 = vadd.f32 %v53, %v54
    %94 = vadd.xlane.f32.xlu0 %v93
    %v95 = vpop.xlane.xlu0 %94
    %v96 = vadd.f32 %v55, %v56
    %97 = vadd.xlane.f32.xlu0 %v96
    %v98 = vpop.xlane.xlu0 %97
    %v99 = vadd.f32 %v57, %v58
    %100 = vadd.xlane.f32.xlu0 %v99
    %v101 = vpop.xlane.xlu0 %100
    %v102 = vadd.f32 %v59, %v60
    %103 = vadd.xlane.f32.xlu0 %v102
    %v104 = vpop.xlane.xlu0 %103
    %v105 = vadd.f32 %v61, %v62
    %106 = vadd.xlane.f32.xlu0 %v105
    %v107 = vpop.xlane.xlu0 %106
    %v108 = vadd.f32 %v63, %v64
    %109 = vadd.xlane.f32.xlu0 %v108
    %v110 = vpop.xlane.xlu0 %109
    %v111 = vadd.f32 %v65, %v66
    %112 = vadd.xlane.f32.xlu0 %v111
    %v113 = vpop.xlane.xlu0 %112
    %v114 = vadd.f32 %v67, %v68
    %115 = vadd.xlane.f32.xlu0 %v114
    %v116 = vpop.xlane.xlu0 %115
    %v117 = vmax.f32 %v37, %v38
    %118 = vmax.xlane.f32.xlu0 %v117
    %v119 = vpop.xlane.xlu0 %118
    %v120 = vmax.f32 %v39, %v40
    %121 = vmax.xlane.f32.xlu0 %v120
    %v122 = vpop.xlane.xlu0 %121
    %v123 = vmax.f32 %v41, %v42
    %124 = vmax.xlane.f32.xlu0 %v123
    %v125 = vpop.xlane.xlu0 %124
    %v126 = vmax.f32 %v43, %v44
    %127 = vmax.xlane.f32.xlu0 %v126
    %v128 = vpop.xlane.xlu0 %127
    %v129 = vmax.f32 %v45, %v46
    %130 = vmax.xlane.f32.xlu0 %v129
    %v131 = vpop.xlane.xlu0 %130
    %v132 = vmax.f32 %v47, %v48
    %133 = vmax.xlane.f32.xlu0 %v132
    %v134 = vpop.xlane.xlu0 %133
    %v135 = vmax.f32 %v49, %v50
    %136 = vmax.xlane.f32.xlu0 %v135
    %v137 = vpop.xlane.xlu0 %136
    %v138 = vmax.f32 %v51, %v52
    %139 = vmax.xlane.f32.xlu0 %v138
    %v140 = vpop.xlane.xlu0 %139
    %v141 = vmax.f32 %v53, %v54
    %142 = vmax.xlane.f32.xlu0 %v141
    %v143 = vpop.xlane.xlu0 %142
    %v144 = vmax.f32 %v55, %v56
    %145 = vmax.xlane.f32.xlu0 %v144
    %v146 = vpop.xlane.xlu0 %145
    %v147 = vmax.f32 %v57, %v58
    %148 = vmax.xlane.f32.xlu0 %v147
    %v149 = vpop.xlane.xlu0 %148
    %v150 = vmax.f32 %v59, %v60
    %151 = vmax.xlane.f32.xlu0 %v150
    %v152 = vpop.xlane.xlu0 %151
    %v153 = vmax.f32 %v61, %v62
    %154 = vmax.xlane.f32.xlu0 %v153
    %v155 = vpop.xlane.xlu0 %154
    %v156 = vmax.f32 %v63, %v64
    %157 = vmax.xlane.f32.xlu0 %v156
    %v158 = vpop.xlane.xlu0 %157
    %v159 = vmax.f32 %v65, %v66
    %160 = vmax.xlane.f32.xlu0 %v159
    %v161 = vpop.xlane.xlu0 %160
    %v162 = vmax.f32 %v67, %v68
    %163 = vmax.xlane.f32.xlu0 %v162
    %v164 = vpop.xlane.xlu0 %163
    %v165 = vmul.f32 %v71, 0.00390625
    %v166 = vmul.f32 %v74, 0.00390625
    %v167 = vmul.f32 %v77, 0.00390625
    %v168 = vmul.f32 %v80, 0.00390625
    %v169 = vmul.f32 %v83, 0.00390625
    %v170 = vmul.f32 %v86, 0.00390625
    %v171 = vmul.f32 %v89, 0.00390625
    %v172 = vmul.f32 %v92, 0.00390625
    %v173 = vmul.f32 %v95, 0.00390625
    %v174 = vmul.f32 %v98, 0.00390625
    %v175 = vmul.f32 %v101, 0.00390625
    %v176 = vmul.f32 %v104, 0.00390625
    %v177 = vmul.f32 %v107, 0.00390625
    %v178 = vmul.f32 %v110, 0.00390625
    %v179 = vmul.f32 %v113, 0.00390625
    %v180 = vmul.f32 %v116, 0.00390625
    %v197 = vlaneseq
    %v198 = vand.u32 %v197, 127
    %v199 = vperm.slane %v165, %v198
    %v200 = vadd.s32 %v198, 4294967288
    %v201 = vperm.slane %v166, %v200
    %vm202 = vcmask 130112
    %v203 = vsel %vm202, %v201, %v199
    %v204 = vadd.s32 %v198, 4294967280
    %v205 = vperm.slane %v167, %v204
    %vm206 = vcmask 195712
    %v207 = vsel %vm206, %v205, %v203
    %v208 = vadd.s32 %v198, 4294967272
    %v209 = vperm.slane %v168, %v208
    %vm210 = vcmask 261312
    %v211 = vsel %vm210, %v209, %v207
    %v212 = vadd.s32 %v198, 4294967264
    %v213 = vperm.slane %v169, %v212
    %vm214 = vcmask 326912
    %v215 = vsel %vm214, %v213, %v211
    %v216 = vadd.s32 %v198, 4294967256
    %v217 = vperm.slane %v170, %v216
    %vm218 = vcmask 392512
    %v219 = vsel %vm218, %v217, %v215
    %v220 = vadd.s32 %v198, 4294967248
    %v221 = vperm.slane %v171, %v220
    %vm222 = vcmask 458112
    %v223 = vsel %vm222, %v221, %v219
    %v224 = vadd.s32 %v198, 4294967240
    %v225 = vperm.slane %v172, %v224
    %vm226 = vcmask 523712
    %v227 = vsel %vm226, %v225, %v223
    %v228 = vperm.slane %v173, %v198
    %v229 = vperm.slane %v174, %v200
    %v230 = vsel %vm202, %v229, %v228
    %v231 = vperm.slane %v175, %v204
    %v232 = vsel %vm206, %v231, %v230
    %v233 = vperm.slane %v176, %v208
    %v234 = vsel %vm210, %v233, %v232
    %v235 = vperm.slane %v177, %v212
    %v236 = vsel %vm214, %v235, %v234
    %v237 = vperm.slane %v178, %v216
    %v238 = vsel %vm218, %v237, %v236
    %v239 = vperm.slane %v179, %v220
    %v240 = vsel %vm222, %v239, %v238
    %v241 = vperm.slane %v180, %v224
    %v242 = vsel %vm226, %v241, %v240
    %vm243 = vcmask 1041409
    %v244 = vsel %vm243, %v242, %v227
    %v262 = vperm.slane %v119, %v198
    %v263 = vperm.slane %v122, %v200
    %v264 = vsel %vm202, %v263, %v262
    %v265 = vperm.slane %v125, %v204
    %v266 = vsel %vm206, %v265, %v264
    %v267 = vperm.slane %v128, %v208
    %v268 = vsel %vm210, %v267, %v266
    %v269 = vperm.slane %v131, %v212
    %v270 = vsel %vm214, %v269, %v268
    %v271 = vperm.slane %v134, %v216
    %v272 = vsel %vm218, %v271, %v270
    %v273 = vperm.slane %v137, %v220
    %v274 = vsel %vm222, %v273, %v272
    %v275 = vperm.slane %v140, %v224
    %v276 = vsel %vm226, %v275, %v274
    %v277 = vperm.slane %v143, %v198
    %v278 = vperm.slane %v146, %v200
    %v279 = vsel %vm202, %v278, %v277
    %v280 = vperm.slane %v149, %v204
    %v281 = vsel %vm206, %v280, %v279
    %v282 = vperm.slane %v152, %v208
    %v283 = vsel %vm210, %v282, %v281
    %v284 = vperm.slane %v155, %v212
    %v285 = vsel %vm214, %v284, %v283
    %v286 = vperm.slane %v158, %v216
    %v287 = vsel %vm218, %v286, %v285
    %v288 = vperm.slane %v161, %v220
    %v289 = vsel %vm222, %v288, %v287
    %v290 = vperm.slane %v164, %v224
    %v291 = vsel %vm226, %v290, %v289
    %vm292 = vcmask 1043459
    %v293 = vsel %vm292, %v291, %v276
    %vm295 = vcmask 1041408
    %v296 = vsel %vm295, %v244, %v293
    %v297 = vld [vmem:[%s1] sm:$0xff]
    %v298 = vld [vmem:[%s1 + $0x8] sm:$0xff]
    %v299 = vld [vmem:[%s1 + $0x10] sm:$0xff]
    %v300 = vld [vmem:[%s1 + $0x18] sm:$0xff]
    %v301 = vld [vmem:[%s1 + $0x20] sm:$0xff]
    %v302 = vld [vmem:[%s1 + $0x28] sm:$0xff]
    %v303 = vld [vmem:[%s1 + $0x30] sm:$0xff]
    %v304 = vld [vmem:[%s1 + $0x38] sm:$0xff]
    %v305 = vld [vmem:[%s2] sm:$0x1]
    %v307 = vperm.slane %v305, 0
    %vm309 = vcmask 523264
    %v311 = vsel %vm309, %v296, 0
    %313 = vmatpush.msra.mxu0 0.0
    %314 = vmatpush.msra.mxu0 0.0
    %315 = vmatpush.msra.mxu0 0.0
    %316 = vmatpush.msra.mxu0 0.0
    %317 = vmatpush.msra.mxu0 0.0
    %318 = vmatpush.msra.mxu0 0.0
    %319 = vmatpush.msra.mxu0 0.0
    %320 = vmatpush.msra.mxu0 0.0
    %321 = vmatpush.msra.mxu0 %v304
    %322 = vmatpush.msra.mxu0 %v303
    %323 = vmatpush.msra.mxu0 %v302
    %324 = vmatpush.msra.mxu0 %v301
    %325 = vmatpush.msra.mxu0 %v300
    %326 = vmatpush.msra.mxu0 %v299
    %327 = vmatpush.msra.mxu0 %v298
    %328 = vmatpush.msra.mxu0 %v297
    %329 = vmatmul.f32.gmra.mxu0 %v311
    %v330 = vpop.f32.mrf.mxu0
    %v331 = vadd.f32 %v307, %v330
    %332 = vdwg.mxu0
    %v333 = vmax.f32 %v331, 0.0
    %v334 = vld [vmem:[%s3] sm:$0xf]
    %v335 = vld [vmem:[%s4] sm:$0x1]
    %v337 = vperm.slane %v335, 0
    %vm339 = vcmask 31744
    %v341 = vsel %vm339, %v333, 0
    %vm343 = vcmask 1043456
    %v345 = vsel %vm343, %v334, 0
    %347 = vmatpush.msra.mxu0 0.0
    %348 = vmatpush.msra.mxu0 0.0
    %349 = vmatpush.msra.mxu0 0.0
    %350 = vmatpush.msra.mxu0 0.0
    %351 = vmatpush.msra.mxu0 0.0
    %352 = vmatpush.msra.mxu0 0.0
    %353 = vmatpush.msra.mxu0 0.0
    %354 = vmatpush.msra.mxu0 0.0
    %355 = vmatpush.msra.mxu0 0.0
    %356 = vmatpush.msra.mxu0 0.0
    %357 = vmatpush.msra.mxu0 0.0
    %358 = vmatpush.msra.mxu0 0.0
    %359 = vmatpush.msra.mxu0 0.0
    %360 = vmatpush.msra.mxu0 0.0
    %361 = vmatpush.msra.mxu0 0.0
    %362 = vmatpush.msra.mxu0 %v345
    %363 = vmatmul.f32.gmra.mxu0 %v341
    %v364 = vpop.f32.mrf.mxu0
    %v365 = vadd.f32 %v337, %v364
    %366 = vdwg.mxu0
    %v367 = vxor.u32 %v365, 2147483648
    %v368 = vmul.f32 %v367, 1.442695
    %v369 = vpow.pop %v368
    %v370 = vadd.f32 %v369, 1.0
    %v371 = vrcp.pop %v370
    %v372 = vmul.f32 %v370, %v371
    %v373 = vsub.f32 1.0, %v372
    %v374 = vmul.f32 %v371, %v373
    %v375 = vadd.f32 %v371, %v374
    %vm376 = vweird.f32 %v370
    %vm377 = vweird.f32 %v371
    %vm378 = vmor %vm376, %vm377
    %v379 = vsel %vm378, %v371, %v375
    %v380 = vand.u32 2147483647, %v370
    %vm381 = vcmp.eq.f32.partialorder %v380, 8.507059e+37
    %v382 = vand.u32 %v370, 2147483648
    %v383 = vor.u32 1.1754944e-38, %v382
    %v384 = vsel %vm381, %v383, %v379
    %v385 = vmul.f32 1.0, %v384
    %v387 = vrot.slane %v385, 2
    %v389 = vadd.f32 %v385, %v387
    %v390 = vperm.slane %v389, 0
    %v391 = vlaneseq
    %v392 = vshrl.u32 %v391, 7
    %394 = vset.pattern.permute.xlu0 %v392
    %395 = vperm.xlu0 %394, %v390
    %v396 = vpop.permute.xlu0 %395
    %v397 = vlaneseq
    %v398 = vshrl.u32 %v397, 7
    %v399 = vadd.s32 %v398, 8
    %400 = vset.pattern.permute.xlu0 %v399
    %401 = vperm.xlu0 %400, %v390
    %v402 = vpop.permute.xlu0 %401
    %v403 = vlaneseq
    %v404 = vshrl.u32 %v403, 7
    %v405 = vadd.s32 %v404, 16
    %406 = vset.pattern.permute.xlu0 %v405
    %407 = vperm.xlu0 %406, %v390
    %v408 = vpop.permute.xlu0 %407
    %v409 = vlaneseq
    %v410 = vshrl.u32 %v409, 7
    %v411 = vadd.s32 %v410, 24
    %412 = vset.pattern.permute.xlu0 %v411
    %413 = vperm.xlu0 %412, %v390
    %v414 = vpop.permute.xlu0 %413
    %v415 = vlaneseq
    %v416 = vshrl.u32 %v415, 7
    %v417 = vadd.s32 %v416, 32
    %418 = vset.pattern.permute.xlu0 %v417
    %419 = vperm.xlu0 %418, %v390
    %v420 = vpop.permute.xlu0 %419
    %v421 = vlaneseq
    %v422 = vshrl.u32 %v421, 7
    %v423 = vadd.s32 %v422, 40
    %424 = vset.pattern.permute.xlu0 %v423
    %425 = vperm.xlu0 %424, %v390
    %v426 = vpop.permute.xlu0 %425
    %v427 = vlaneseq
    %v428 = vshrl.u32 %v427, 7
    %v429 = vadd.s32 %v428, 48
    %430 = vset.pattern.permute.xlu0 %v429
    %431 = vperm.xlu0 %430, %v390
    %v432 = vpop.permute.xlu0 %431
    %v433 = vlaneseq
    %v434 = vshrl.u32 %v433, 7
    %v435 = vadd.s32 %v434, 56
    %436 = vset.pattern.permute.xlu0 %v435
    %437 = vperm.xlu0 %436, %v390
    %v438 = vpop.permute.xlu0 %437
    %v439 = vperm.slane %v389, 1
    %v440 = vlaneseq
    %v441 = vshrl.u32 %v440, 7
    %443 = vset.pattern.permute.xlu0 %v441
    %444 = vperm.xlu0 %443, %v439
    %v445 = vpop.permute.xlu0 %444
    %v446 = vlaneseq
    %v447 = vshrl.u32 %v446, 7
    %v448 = vadd.s32 %v447, 8
    %449 = vset.pattern.permute.xlu0 %v448
    %450 = vperm.xlu0 %449, %v439
    %v451 = vpop.permute.xlu0 %450
    %v452 = vlaneseq
    %v453 = vshrl.u32 %v452, 7
    %v454 = vadd.s32 %v453, 16
    %455 = vset.pattern.permute.xlu0 %v454
    %456 = vperm.xlu0 %455, %v439
    %v457 = vpop.permute.xlu0 %456
    %v458 = vlaneseq
    %v459 = vshrl.u32 %v458, 7
    %v460 = vadd.s32 %v459, 24
    %461 = vset.pattern.permute.xlu0 %v460
    %462 = vperm.xlu0 %461, %v439
    %v463 = vpop.permute.xlu0 %462
    %v464 = vlaneseq
    %v465 = vshrl.u32 %v464, 7
    %v466 = vadd.s32 %v465, 32
    %467 = vset.pattern.permute.xlu0 %v466
    %468 = vperm.xlu0 %467, %v439
    %v469 = vpop.permute.xlu0 %468
    %v470 = vlaneseq
    %v471 = vshrl.u32 %v470, 7
    %v472 = vadd.s32 %v471, 40
    %473 = vset.pattern.permute.xlu0 %v472
    %474 = vperm.xlu0 %473, %v439
    %v475 = vpop.permute.xlu0 %474
    %v476 = vlaneseq
    %v477 = vshrl.u32 %v476, 7
    %v478 = vadd.s32 %v477, 48
    %479 = vset.pattern.permute.xlu0 %v478
    %480 = vperm.xlu0 %479, %v439
    %v481 = vpop.permute.xlu0 %480
    %v482 = vlaneseq
    %v483 = vshrl.u32 %v482, 7
    %v484 = vadd.s32 %v483, 56
    %485 = vset.pattern.permute.xlu0 %v484
    %486 = vperm.xlu0 %485, %v439
    %v487 = vpop.permute.xlu0 %486
    %v488 = vmul.f32 %v37, %v396
    %v489 = vmul.f32 %v38, %v396
    %v490 = vmul.f32 %v39, %v402
    %v491 = vmul.f32 %v40, %v402
    %v492 = vmul.f32 %v41, %v408
    %v493 = vmul.f32 %v42, %v408
    %v494 = vmul.f32 %v43, %v414
    %v495 = vmul.f32 %v44, %v414
    %v496 = vmul.f32 %v45, %v420
    %v497 = vmul.f32 %v46, %v420
    %v498 = vmul.f32 %v47, %v426
    %v499 = vmul.f32 %v48, %v426
    %v500 = vmul.f32 %v49, %v432
    %v501 = vmul.f32 %v50, %v432
    %v502 = vmul.f32 %v51, %v438
    %v503 = vmul.f32 %v52, %v438
    %v504 = vmul.f32 %v53, %v445
    %v505 = vmul.f32 %v54, %v445
    %v506 = vmul.f32 %v55, %v451
    %v507 = vmul.f32 %v56, %v451
    %v508 = vmul.f32 %v57, %v457
    %v509 = vmul.f32 %v58, %v457
    %v510 = vmul.f32 %v59, %v463
    %v511 = vmul.f32 %v60, %v463
    %v512 = vmul.f32 %v61, %v469
    %v513 = vmul.f32 %v62, %v469
    %v514 = vmul.f32 %v63, %v475
    %v515 = vmul.f32 %v64, %v475
    %v516 = vmul.f32 %v65, %v481
    %v517 = vmul.f32 %v66, %v481
    %v518 = vmul.f32 %v67, %v487
    %v519 = vmul.f32 %v68, %v487
    %520 = vst [vmem:[#allocation5] sm:$0xff] %v488
    %521 = vst [vmem:[#allocation5 + $0x8] sm:$0xff] %v489
    %522 = vst [vmem:[#allocation5 + $0x10] sm:$0xff] %v490
    %523 = vst [vmem:[#allocation5 + $0x18] sm:$0xff] %v491
    %524 = vst [vmem:[#allocation5 + $0x20] sm:$0xff] %v492
    %525 = vst [vmem:[#allocation5 + $0x28] sm:$0xff] %v493
    %526 = vst [vmem:[#allocation5 + $0x30] sm:$0xff] %v494
    %527 = vst [vmem:[#allocation5 + $0x38] sm:$0xff] %v495
    %528 = vst [vmem:[#allocation5 + $0x40] sm:$0xff] %v496
    %529 = vst [vmem:[#allocation5 + $0x48] sm:$0xff] %v497
    %530 = vst [vmem:[#allocation5 + $0x50] sm:$0xff] %v498
    %531 = vst [vmem:[#allocation5 + $0x58] sm:$0xff] %v499
    %532 = vst [vmem:[#allocation5 + $0x60] sm:$0xff] %v500
    %533 = vst [vmem:[#allocation5 + $0x68] sm:$0xff] %v501
    %534 = vst [vmem:[#allocation5 + $0x70] sm:$0xff] %v502
    %535 = vst [vmem:[#allocation5 + $0x78] sm:$0xff] %v503
    %536 = vst [vmem:[#allocation5 + $0x80] sm:$0xff] %v504
    %537 = vst [vmem:[#allocation5 + $0x88] sm:$0xff] %v505
    %538 = vst [vmem:[#allocation5 + $0x90] sm:$0xff] %v506
    %539 = vst [vmem:[#allocation5 + $0x98] sm:$0xff] %v507
    %540 = vst [vmem:[#allocation5 + $0xa0] sm:$0xff] %v508
    %541 = vst [vmem:[#allocation5 + $0xa8] sm:$0xff] %v509
    %542 = vst [vmem:[#allocation5 + $0xb0] sm:$0xff] %v510
    %543 = vst [vmem:[#allocation5 + $0xb8] sm:$0xff] %v511
    %544 = vst [vmem:[#allocation5 + $0xc0] sm:$0xff] %v512
    %545 = vst [vmem:[#allocation5 + $0xc8] sm:$0xff] %v513
    %546 = vst [vmem:[#allocation5 + $0xd0] sm:$0xff] %v514
    %547 = vst [vmem:[#allocation5 + $0xd8] sm:$0xff] %v515
    %548 = vst [vmem:[#allocation5 + $0xe0] sm:$0xff] %v516
    %549 = vst [vmem:[#allocation5 + $0xe8] sm:$0xff] %v517
    %550 = vst [vmem:[#allocation5 + $0xf0] sm:$0xff] %v518
    %551 = vst [vmem:[#allocation5 + $0xf8] sm:$0xff] %v519
    // Predicated region
    $region26: #{tpu_custom_call.1} parent=1 // pred_check
      _
    $region27: #{tpu_custom_call.1} parent=1 // pred_check_branch
      %553 = sbr.rel (0) target = $region29
    $region28: #{tpu_custom_call.1} parent=1 // pred_region
      %555 = vsyncadd [#allocation4], 0
      %s556 = sshll.u32 [#allocation5], 4
      %s557 = int_to_ptr.vmem [resolvable:$true] %s556
      %s558 = sshll.u32 %s5, 4
      %s559 = int_to_ptr.hbm [resolvable:$true] %s558
      %564 = dma.vmem_to_hbm [thread:$0]  %s557, 4096, %s559, [#allocation4], 256, 256, 16
    $region29: #{tpu_custom_call.1} parent=1 // pred_fallthru
      _
    // Predicated region
    $region30: #{tpu_custom_call.1} parent=1 // pred_check
      _
    $region31: #{tpu_custom_call.1} parent=1 // pred_check_branch
      %566 = sbr.rel (0) target = $region33
    $region32: #{tpu_custom_call.1} parent=1 // pred_region
      %568 = dma.done [#allocation4], 4096
    $region33: #{tpu_custom_call.1} parent=1 // pred_fallthru
      _
    %569 = vsyncpa [#allocation3], 1
    %570 = vsyncpa [#allocation4], 1

</llo_original>
